<compile_context>
chip_gen: v7x
topology: tpu7x:2x2x1
jax: 0.10.0
libtpu: 0.0.40
codegen_flags: <defaults>
</compile_context>

<pallas_src>
import jax
import jax.numpy as jnp
from jax.experimental import pallas as pl
from jax.experimental.pallas import tpu as pltpu


def _round_up(n, m):
    return ((n + m - 1) // m) * m


def _default_max_batch_tile():
    # Larger tiles on 128 MiB-VMEM parts (v5e/v6e); keep headroom on v7x (64 MiB).
    try:
        info = pltpu.get_tpu_info()
        vmem = getattr(info, "vmem_capacity_bytes", None)
        if vmem is not None and vmem >= 96 * 1024 * 1024:
            return 2048
    except Exception:
        pass
    return 1024


def _make_critic_kernel(h0):
    def critic_kernel(scale_ref, shift_ref,
                      w1_ref, b1_ref,
                      w2_ref, b2_ref,
                      w3_ref, b3_ref,
                      xa_ref, out_ref):
        # Affine BatchNorm with batch stats precomputed in the wrapper.
        # scale/shift are identity (1, 0) on the action columns, so the action
        # passes through unchanged.  Elementwise path stays f32.
        x = xa_ref[...].astype(jnp.float32) * scale_ref[...] + shift_ref[...]

        # fc1 fused with an identity pass-through block for the action columns:
        # pre1[:, :H0] = xs @ W1 + b1,  pre1[:, H0:] = action.
        pre1 = jnp.dot(x.astype(w1_ref.dtype), w1_ref[...],
                       preferred_element_type=jnp.float32) + b1_ref[...]
        # ReLU only on the fc1 columns; action columns pass through.
        col = jax.lax.broadcasted_iota(jnp.int32, pre1.shape, 1)
        x2 = jnp.where(col < h0, jnp.maximum(pre1, 0.0), pre1)

        # layers[0] on concat([relu(h1), action]) as a single matmul against
        # the stacked W2 = [w2s; w2a].
        h2 = jnp.dot(x2.astype(w2_ref.dtype), w2_ref[...],
                     preferred_element_type=jnp.float32) + b2_ref[...]
        h2 = jnp.maximum(h2, 0.0)

        # out_layer: w3 zero-padded to 8 columns -> narrow (TB, 8) f32 store.
        out_ref[...] = jnp.dot(h2.astype(w3_ref.dtype), w3_ref[...],
                               preferred_element_type=jnp.float32) + b3_ref[...]

    return critic_kernel


def prepare_params(params, compute_dtype=jnp.bfloat16, out_width=8):
    """One-time weight layout/casting (hoisted out of the per-call path)."""
    w1 = params["w1"].astype(jnp.float32)    # (S, H0)
    w2s = params["w2s"].astype(jnp.float32)  # (H0, H1)
    w2a = params["w2a"].astype(jnp.float32)  # (A, H1)
    w3 = params["w3"].astype(jnp.float32)    # (H1, 1)
    S, H0 = w1.shape
    A, H1 = w2a.shape

    # Layer-1 weight extended with an identity block that carries the action
    # columns through to the layer-2 input (no in-kernel slice/concat needed).
    w1_big = jnp.zeros((S + A, H0 + A), jnp.float32)
    w1_big = w1_big.at[:S, :H0].set(w1)
    w1_big = w1_big.at[S:, H0:].set(jnp.eye(A, dtype=jnp.float32))
    b1_big = jnp.concatenate(
        [params["b1"].astype(jnp.float32), jnp.zeros((1, A), jnp.float32)], axis=1)

    w2_stack = jnp.concatenate([w2s, w2a], axis=0)          # (H0+A, H1)

    w3_pad = jnp.zeros((H1, out_width), jnp.float32).at[:, :1].set(w3)
    b3_pad = jnp.zeros((1, out_width), jnp.float32).at[:, :1].set(
        params["b3"].astype(jnp.float32))

    return {
        "dims": (S, A, H0, H1, out_width),
        "w1": w1_big.astype(compute_dtype),
        "b1": b1_big,
        "w2": w2_stack.astype(compute_dtype),
        "b2": params["b2"].astype(jnp.float32),
        "w3": w3_pad.astype(compute_dtype),
        "b3": b3_pad,
        "bn_gamma": params["bn_gamma"].astype(jnp.float32),
        "bn_beta": params["bn_beta"].astype(jnp.float32),
    }


def critic_forward(state, action, prep, *, eps=1e-5, max_batch_tile=None):
    S, A, H0, H1, OUTW = prep["dims"]
    B = state.shape[0]
    assert state.shape == (B, S) and action.shape == (B, A)

    state = state.astype(jnp.float32)
    action = action.astype(jnp.float32)

    # --- BatchNorm batch statistics hoisted out of the kernel (training mode:
    # batch mean, biased variance), fused to per-feature scale/shift. Identity
    # scale/shift on the action columns of the concatenated stream.
    # TODO(synk): BatchNorm1d running-stat buffer updates (training side effect)
    # are not emulated; only the forward value is computed.
    mean = jnp.mean(state, axis=0, keepdims=True)
    var = jnp.mean(jnp.square(state - mean), axis=0, keepdims=True)
    scale = prep["bn_gamma"] * jax.lax.rsqrt(var + eps)
    shift = prep["bn_beta"] - scale * mean
    scale_full = jnp.concatenate([scale, jnp.ones((1, A), jnp.float32)], axis=1)
    shift_full = jnp.concatenate([shift, jnp.zeros((1, A), jnp.float32)], axis=1)

    # Single narrow activation stream [state | action], streamed in bf16.
    act_dtype = prep["w1"].dtype
    xa = jnp.concatenate([state, action], axis=1).astype(act_dtype)

    # --- batch tiling: 16-row granule (bf16 sublane packing); for large batches
    # use >= 2 grid steps so the "parallel" axis shards across v7x's 2 TCs.
    ROW = 16
    if max_batch_tile is None:
        max_batch_tile = _default_max_batch_tile()
    B_r = _round_up(B, ROW)
    TB = min(max_batch_tile, _round_up(-(-B_r // 2), ROW))
    TB = max(TB, ROW)
    Bp = _round_up(B_r, TB)
    if Bp > B:
        xa = jnp.pad(xa, ((0, Bp - B), (0, 0)))
    grid = (Bp // TB,)

    # --- VMEM budget from actual tile math (+ headroom), clamped to 64 MiB.
    weight_bytes = 0
    for k in ("w1", "b1", "w2", "b2", "w3", "b3"):
        arr = prep[k]
        weight_bytes += arr.size * arr.dtype.itemsize
    weight_bytes += 2 * (S + A) * 4  # scale_full / shift_full
    blk_in = TB * (S + A) * xa.dtype.itemsize
    blk_out = TB * OUTW * 4
    vmem_limit = int(min(64 << 20,
                         max(8 << 20,
                             2 * (blk_in + blk_out) + 2 * weight_bytes + (2 << 20))))

    # --- cost estimate from true (unpadded) dims.
    flops = 2 * B * (S * H0 + (H0 + A) * H1 + H1 * 1)
    bytes_accessed = int(Bp * (S + A) * xa.dtype.itemsize
                         + Bp * OUTW * 4
                         + weight_bytes)

    def full(shape):
        # Whole-array (weight/bias/BN) spec: constant block index -> fetched
        # once and resident across all grid steps.
        return pl.BlockSpec(shape, lambda i: (0, 0))

    out = pl.pallas_call(
        _make_critic_kernel(H0),
        out_shape=jax.ShapeDtypeStruct((Bp, OUTW), jnp.float32),
        grid=grid,
        in_specs=[
            full((1, S + A)), full((1, S + A)),
            full((S + A, H0 + A)), full((1, H0 + A)),
            full((H0 + A, H1)), full((1, H1)),
            full((H1, OUTW)), full((1, OUTW)),
            pl.BlockSpec((TB, S + A), lambda i: (i, 0)),
        ],
        out_specs=pl.BlockSpec((TB, OUTW), lambda i: (i, 0)),
        compiler_params=pltpu.CompilerParams(
            dimension_semantics=("parallel",),
            vmem_limit_bytes=vmem_limit,
        ),
        cost_estimate=pl.CostEstimate(
            flops=flops, transcendentals=0, bytes_accessed=bytes_accessed),
    )(scale_full, shift_full,
      prep["w1"], prep["b1"], prep["w2"], prep["b2"], prep["w3"], prep["b3"],
      xa)

    # Only column 0 carries the Q value.
    return out[:B, :1]


def init_params(key, state_size, action_size, hidden_layers=(32, 32)):
    """Deterministic init mirroring Critic.reset_parameters().

    PyTorch hidden_init uses 1/sqrt(weight.size(0)) == 1/sqrt(out_features).
    Biases keep the PyTorch Linear default uniform(+-1/sqrt(in_features));
    note reset_parameters only overrides out_layer.weight (not its bias).
    Weights stored as (in_features, out_features) so y = x @ W + b.
    """
    h0, h1 = hidden_layers
    keys = jax.random.split(key, 8)

    def u(k, shape, lim):
        return jax.random.uniform(k, shape, jnp.float32, -lim, lim)

    return {
        # BatchNorm1d affine params (PyTorch default: gamma=1, beta=0)
        "bn_gamma": jnp.ones((1, state_size), jnp.float32),
        "bn_beta": jnp.zeros((1, state_size), jnp.float32),
        # fc1: Linear(state_size, h0); weight lim = 1/sqrt(h0)
        "w1": u(keys[0], (state_size, h0), 1.0 / jnp.sqrt(h0)),
        "b1": u(keys[1], (1, h0), 1.0 / jnp.sqrt(state_size)),
        # layers[0]: Linear(h0 + action_size, h1); weight lim = 1/sqrt(h1)
        # split into state-part (h0 rows) and action-part (action_size rows)
        "w2s": u(keys[2], (h0, h1), 1.0 / jnp.sqrt(h1)),
        "w2a": u(keys[3], (action_size, h1), 1.0 / jnp.sqrt(h1)),
        "b2": u(keys[4], (1, h1), 1.0 / jnp.sqrt(h0 + action_size)),
        # out_layer: Linear(h1, 1); weight uniform(-0.003, 0.003),
        # bias keeps the default uniform(+-1/sqrt(h1)).
        "w3": u(keys[5], (h1, 1), 0.003),
        "b3": u(keys[6], (1, 1), 1.0 / jnp.sqrt(h1)),
    }


def critic_reference(state, action, params, *, eps=1e-5):
    """Pure-JAX f32 reference of the same forward pass (for verification)."""
    mean = jnp.mean(state, axis=0, keepdims=True)
    var = jnp.mean((state - mean) ** 2, axis=0, keepdims=True)
    xs = params["bn_gamma"] * (state - mean) / jnp.sqrt(var + eps) + params["bn_beta"]
    h1 = jax.nn.relu(xs @ params["w1"] + params["b1"])
    x = jnp.concatenate([h1, action], axis=1)
    w2 = jnp.concatenate([params["w2s"], params["w2a"]], axis=0)
    h2 = jax.nn.relu(x @ w2 + params["b2"])
    return h2 @ params["w3"] + params["b3"]


if __name__ == "__main__":
    key = jax.random.PRNGKey(0)
    k_state, k_action, k_params = jax.random.split(key, 3)

    batch = 8
    state_size = 16
    action_size = 4
    hidden_layers = (32, 32)

    state = jax.random.normal(k_state, (batch, state_size), jnp.float32)
    action = jax.random.normal(k_action, (batch, action_size), jnp.float32)
    params = init_params(k_params, state_size, action_size, hidden_layers)

    prep = prepare_params(params)          # one-time weight layout/casting
    q = critic_forward(state, action, prep)
    q = jax.block_until_ready(q)

    q_ref = critic_reference(state, action, params)
    assert q.shape == (batch, 1), q.shape
    # bf16 matmul operands (f32 accumulation) vs. the pure-f32 reference.
    assert jnp.allclose(q, q_ref, atol=5e-3, rtol=5e-3), (q, q_ref)

    print("KERNEL_OK")
</pallas_src>

<mosaic_0001>
module attributes {stable_mosaic.version = 11 : i64} {
  func.func @critic_kernel(%arg0: i32, %arg1: memref<1x20xf32, #tpu.memory_space<vmem>>, %arg2: memref<1x20xf32, #tpu.memory_space<vmem>>, %arg3: memref<20x36xbf16, #tpu.memory_space<vmem>>, %arg4: memref<1x36xf32, #tpu.memory_space<vmem>>, %arg5: memref<36x32xbf16, #tpu.memory_space<vmem>>, %arg6: memref<1x32xf32, #tpu.memory_space<vmem>>, %arg7: memref<32x8xbf16, #tpu.memory_space<vmem>>, %arg8: memref<1x8xf32, #tpu.memory_space<vmem>>, %arg9: memref<16x20xbf16, #tpu.memory_space<vmem>>, %arg10: memref<16x8xf32, #tpu.memory_space<vmem>>) attributes {dimension_semantics = [#tpu.dimension_semantics<parallel>], iteration_bounds = array<i64: 1>, scalar_prefetch = 0 : i64, scratch_operands = 0 : i64, tpu.core_type = #tpu.core_type<tc>, window_params = [{pipeline_mode = #tpu.pipeline_mode<synchronous>, transform_indices = @transform_0, window_bounds = array<i64: 1, 20>}, {pipeline_mode = #tpu.pipeline_mode<synchronous>, transform_indices = @transform_1, window_bounds = array<i64: 1, 20>}, {pipeline_mode = #tpu.pipeline_mode<synchronous>, transform_indices = @transform_2, window_bounds = array<i64: 20, 36>}, {pipeline_mode = #tpu.pipeline_mode<synchronous>, transform_indices = @transform_3, window_bounds = array<i64: 1, 36>}, {pipeline_mode = #tpu.pipeline_mode<synchronous>, transform_indices = @transform_4, window_bounds = array<i64: 36, 32>}, {pipeline_mode = #tpu.pipeline_mode<synchronous>, transform_indices = @transform_5, window_bounds = array<i64: 1, 32>}, {pipeline_mode = #tpu.pipeline_mode<synchronous>, transform_indices = @transform_6, window_bounds = array<i64: 32, 8>}, {pipeline_mode = #tpu.pipeline_mode<synchronous>, transform_indices = @transform_7, window_bounds = array<i64: 1, 8>}, {transform_indices = @transform_8, window_bounds = array<i64: 16, 20>}, {transform_indices = @transform_9, window_bounds = array<i64: 16, 8>}]} {
    %c0 = arith.constant 0 : index
    %c0_0 = arith.constant 0 : index
    %0 = vector.load %arg9[%c0, %c0_0] : memref<16x20xbf16, #tpu.memory_space<vmem>>, vector<16x20xbf16>
    %1 = arith.extf %0 : vector<16x20xbf16> to vector<16x20xf32>
    %c0_1 = arith.constant 0 : index
    %c0_2 = arith.constant 0 : index
    %2 = vector.load %arg1[%c0_1, %c0_2] : memref<1x20xf32, #tpu.memory_space<vmem>>, vector<1x20xf32>
    %3 = vector.broadcast %2 : vector<1x20xf32> to vector<16x20xf32>
    %4 = arith.mulf %1, %3 : vector<16x20xf32>
    %c0_3 = arith.constant 0 : index
    %c0_4 = arith.constant 0 : index
    %5 = vector.load %arg2[%c0_3, %c0_4] : memref<1x20xf32, #tpu.memory_space<vmem>>, vector<1x20xf32>
    %6 = vector.broadcast %5 : vector<1x20xf32> to vector<16x20xf32>
    %7 = arith.addf %4, %6 : vector<16x20xf32>
    %8 = arith.truncf %7 : vector<16x20xf32> to vector<16x20xbf16>
    %c0_5 = arith.constant 0 : index
    %c0_6 = arith.constant 0 : index
    %9 = vector.load %arg3[%c0_5, %c0_6] : memref<20x36xbf16, #tpu.memory_space<vmem>>, vector<20x36xbf16>
    %cst = arith.constant dense<0.000000e+00> : vector<16x36xf32>
    %10 = tpu.matmul %8, %9, %cst {dimension_numbers = #tpu.dot_dimension_numbers<[1], [0], [0], [1], [0, 0, 1, 1], [], []>} : vector<16x20xbf16>, vector<20x36xbf16>, vector<16x36xf32> -> vector<16x36xf32>
    %c0_7 = arith.constant 0 : index
    %c0_8 = arith.constant 0 : index
    %11 = vector.load %arg4[%c0_7, %c0_8] : memref<1x36xf32, #tpu.memory_space<vmem>>, vector<1x36xf32>
    %12 = vector.broadcast %11 : vector<1x36xf32> to vector<16x36xf32>
    %13 = arith.addf %10, %12 : vector<16x36xf32>
    %14 = tpu.iota {dimensions = array<i32: 1>} : vector<16x36xi32>
    %c32_i32 = arith.constant 32 : i32
    %15 = vector.broadcast %c32_i32 : i32 to vector<16x36xi32>
    %16 = arith.cmpi slt, %14, %15 : vector<16x36xi32>
    %cst_9 = arith.constant 0.000000e+00 : f32
    %17 = vector.broadcast %cst_9 : f32 to vector<16x36xf32>
    %18 = arith.maximumf %13, %17 : vector<16x36xf32>
    %19 = arith.select %16, %18, %13 : vector<16x36xi1>, vector<16x36xf32>
    %20 = arith.truncf %19 : vector<16x36xf32> to vector<16x36xbf16>
    %c0_10 = arith.constant 0 : index
    %c0_11 = arith.constant 0 : index
    %21 = vector.load %arg5[%c0_10, %c0_11] : memref<36x32xbf16, #tpu.memory_space<vmem>>, vector<36x32xbf16>
    %cst_12 = arith.constant dense<0.000000e+00> : vector<16x32xf32>
    %22 = tpu.matmul %20, %21, %cst_12 {dimension_numbers = #tpu.dot_dimension_numbers<[1], [0], [0], [1], [0, 0, 1, 1], [], []>} : vector<16x36xbf16>, vector<36x32xbf16>, vector<16x32xf32> -> vector<16x32xf32>
    %c0_13 = arith.constant 0 : index
    %c0_14 = arith.constant 0 : index
    %23 = vector.load %arg6[%c0_13, %c0_14] : memref<1x32xf32, #tpu.memory_space<vmem>>, vector<1x32xf32>
    %24 = vector.broadcast %23 : vector<1x32xf32> to vector<16x32xf32>
    %25 = arith.addf %22, %24 : vector<16x32xf32>
    %cst_15 = arith.constant 0.000000e+00 : f32
    %26 = vector.broadcast %cst_15 : f32 to vector<16x32xf32>
    %27 = arith.maximumf %25, %26 : vector<16x32xf32>
    %28 = arith.truncf %27 : vector<16x32xf32> to vector<16x32xbf16>
    %c0_16 = arith.constant 0 : index
    %c0_17 = arith.constant 0 : index
    %29 = vector.load %arg7[%c0_16, %c0_17] : memref<32x8xbf16, #tpu.memory_space<vmem>>, vector<32x8xbf16>
    %cst_18 = arith.constant dense<0.000000e+00> : vector<16x8xf32>
    %30 = tpu.matmul %28, %29, %cst_18 {dimension_numbers = #tpu.dot_dimension_numbers<[1], [0], [0], [1], [0, 0, 1, 1], [], []>} : vector<16x32xbf16>, vector<32x8xbf16>, vector<16x8xf32> -> vector<16x8xf32>
    %c0_19 = arith.constant 0 : index
    %c0_20 = arith.constant 0 : index
    %31 = vector.load %arg8[%c0_19, %c0_20] : memref<1x8xf32, #tpu.memory_space<vmem>>, vector<1x8xf32>
    %32 = vector.broadcast %31 : vector<1x8xf32> to vector<16x8xf32>
    %33 = arith.addf %30, %32 : vector<16x8xf32>
    %c0_21 = arith.constant 0 : index
    %c0_22 = arith.constant 0 : index
    %34 = vector.load %arg10[%c0_21, %c0_22] : memref<16x8xf32, #tpu.memory_space<vmem>>, vector<16x8xf32>
    tpu.vector_store %arg10[%c0_21, %c0_22], %33 {strides = array<i32>} : memref<16x8xf32, #tpu.memory_space<vmem>>, vector<16x8xf32>,
    return
  }
  func.func @transform_0(%arg0: i32) -> (i32, i32) {
    %c0_i32 = arith.constant 0 : i32
    %c0_i32_0 = arith.constant 0 : i32
    %c0_i32_1 = arith.constant 0 : i32
    return %c0_i32, %c0_i32_0 : i32, i32
  }
  func.func @transform_1(%arg0: i32) -> (i32, i32) {
    %c0_i32 = arith.constant 0 : i32
    %c0_i32_0 = arith.constant 0 : i32
    %c0_i32_1 = arith.constant 0 : i32
    return %c0_i32, %c0_i32_0 : i32, i32
  }
  func.func @transform_2(%arg0: i32) -> (i32, i32) {
    %c0_i32 = arith.constant 0 : i32
    %c0_i32_0 = arith.constant 0 : i32
    %c0_i32_1 = arith.constant 0 : i32
    return %c0_i32, %c0_i32_0 : i32, i32
  }
  func.func @transform_3(%arg0: i32) -> (i32, i32) {
    %c0_i32 = arith.constant 0 : i32
    %c0_i32_0 = arith.constant 0 : i32
    %c0_i32_1 = arith.constant 0 : i32
    return %c0_i32, %c0_i32_0 : i32, i32
  }
  func.func @transform_4(%arg0: i32) -> (i32, i32) {
    %c0_i32 = arith.constant 0 : i32
    %c0_i32_0 = arith.constant 0 : i32
    %c0_i32_1 = arith.constant 0 : i32
    return %c0_i32, %c0_i32_0 : i32, i32
  }
  func.func @transform_5(%arg0: i32) -> (i32, i32) {
    %c0_i32 = arith.constant 0 : i32
    %c0_i32_0 = arith.constant 0 : i32
    %c0_i32_1 = arith.constant 0 : i32
    return %c0_i32, %c0_i32_0 : i32, i32
  }
  func.func @transform_6(%arg0: i32) -> (i32, i32) {
    %c0_i32 = arith.constant 0 : i32
    %c0_i32_0 = arith.constant 0 : i32
    %c0_i32_1 = arith.constant 0 : i32
    return %c0_i32, %c0_i32_0 : i32, i32
  }
  func.func @transform_7(%arg0: i32) -> (i32, i32) {
    %c0_i32 = arith.constant 0 : i32
    %c0_i32_0 = arith.constant 0 : i32
    %c0_i32_1 = arith.constant 0 : i32
    return %c0_i32, %c0_i32_0 : i32, i32
  }
  func.func @transform_8(%arg0: i32) -> (i32, i32) {
    %c0_i32 = arith.constant 0 : i32
    %c0_i32_0 = arith.constant 0 : i32
    return %arg0, %c0_i32 : i32, i32
  }
  func.func @transform_9(%arg0: i32) -> (i32, i32) {
    %c0_i32 = arith.constant 0 : i32
    %c0_i32_0 = arith.constant 0 : i32
    return %arg0, %c0_i32 : i32, i32
  }
}

</mosaic_0001>

<llo_original>
// kernel: tpu_custom_call.1
$region0: #{tpu_custom_call.1}
  #allocation0 [shape = 'u32[]', space=smem, size = 0x4, offset = 0x4, fixed_abs, tag = 'smem constant byte address 0x4 - core index']
  #allocation1 [shape = 'u32[144,128]{1,0:T(1,128)}', space=vmem, size = 0x12000, scoped, tag = 'internal scratch']
  %s0 = inlined_call_operand.vmem [shape: f32[1,20], index: 0, kind: input, shape index: {}]
  %s1 = inlined_call_operand.vmem [shape: f32[1,20], index: 1, kind: input, shape index: {}]
  %s2 = inlined_call_operand.vmem [shape: bf16[20,36], index: 2, kind: input, shape index: {}]
  %s3 = inlined_call_operand.vmem [shape: f32[1,36], index: 3, kind: input, shape index: {}]
  %s4 = inlined_call_operand.vmem [shape: bf16[36,32], index: 4, kind: input, shape index: {}]
  %s5 = inlined_call_operand.vmem [shape: f32[1,32], index: 5, kind: input, shape index: {}]
  %s6 = inlined_call_operand.vmem [shape: bf16[32,8], index: 6, kind: input, shape index: {}]
  %s7 = inlined_call_operand.vmem [shape: f32[1,8], index: 7, kind: input, shape index: {}]
  %s8 = inlined_call_operand.vmem [shape: bf16[16,20], index: 8, kind: input, shape index: {}]
  %s9 = inlined_call_operand.vmem [shape: f32[16,8], index: 9, kind: output, shape index: {}]
  %s10 = sld [smem:[#allocation0]]
  $region46: #{tpu_custom_call.1} parent=0
    _
  %s12 = ssub.s32 1, %s10
  %s13 = scalar_select 0, %s12, %s10
  // Predicated region
  $region2: #{tpu_custom_call.1} parent=0 // pred_check
    _
  $region3: #{tpu_custom_call.1} parent=0 // pred_check_branch
    %15 = sbr.rel (0) target = $region5
  $region4: #{tpu_custom_call.1} parent=0 // pred_region
    _
  $region5: #{tpu_custom_call.1} parent=0 // pred_fallthru
    _
  // Predicated region
  $region6: #{tpu_custom_call.1} parent=0 // pred_check
    _
  $region7: #{tpu_custom_call.1} parent=0 // pred_check_branch
    %17 = sbr.rel (0) target = $region9
  $region8: #{tpu_custom_call.1} parent=0 // pred_region
    _
  $region9: #{tpu_custom_call.1} parent=0 // pred_fallthru
    _
  // Predicated region
  $region10: #{tpu_custom_call.1} parent=0 // pred_check
    _
  $region11: #{tpu_custom_call.1} parent=0 // pred_check_branch
    %19 = sbr.rel (0) target = $region13
  $region12: #{tpu_custom_call.1} parent=0 // pred_region
    _
  $region13: #{tpu_custom_call.1} parent=0 // pred_fallthru
    _
  // Predicated region
  $region14: #{tpu_custom_call.1} parent=0 // pred_check
    _
  $region15: #{tpu_custom_call.1} parent=0 // pred_check_branch
    %21 = sbr.rel (0) target = $region17
  $region16: #{tpu_custom_call.1} parent=0 // pred_region
    _
  $region17: #{tpu_custom_call.1} parent=0 // pred_fallthru
    _
  // Predicated region
  $region18: #{tpu_custom_call.1} parent=0 // pred_check
    _
  $region19: #{tpu_custom_call.1} parent=0 // pred_check_branch
    %23 = sbr.rel (0) target = $region21
  $region20: #{tpu_custom_call.1} parent=0 // pred_region
    _
  $region21: #{tpu_custom_call.1} parent=0 // pred_fallthru
    _
  // Predicated region
  $region22: #{tpu_custom_call.1} parent=0 // pred_check
    _
  $region23: #{tpu_custom_call.1} parent=0 // pred_check_branch
    %25 = sbr.rel (0) target = $region25
  $region24: #{tpu_custom_call.1} parent=0 // pred_region
    _
  $region25: #{tpu_custom_call.1} parent=0 // pred_fallthru
    _
  // Predicated region
  $region26: #{tpu_custom_call.1} parent=0 // pred_check
    _
  $region27: #{tpu_custom_call.1} parent=0 // pred_check_branch
    %27 = sbr.rel (0) target = $region29
  $region28: #{tpu_custom_call.1} parent=0 // pred_region
    _
  $region29: #{tpu_custom_call.1} parent=0 // pred_fallthru
    _
  // Predicated region
  $region30: #{tpu_custom_call.1} parent=0 // pred_check
    _
  $region31: #{tpu_custom_call.1} parent=0 // pred_check_branch
    %29 = sbr.rel (0) target = $region33
  $region32: #{tpu_custom_call.1} parent=0 // pred_region
    _
  $region33: #{tpu_custom_call.1} parent=0 // pred_fallthru
    _
  // Predicated region
  $region34: #{tpu_custom_call.1} parent=0 // pred_check
    _
  $region35: #{tpu_custom_call.1} parent=0 // pred_check_branch
    %31 = sbr.rel (0) target = $region37
  $region36: #{tpu_custom_call.1} parent=0 // pred_region
    _
  $region37: #{tpu_custom_call.1} parent=0 // pred_fallthru
    _
  %v33 = vld [vmem:[%s8] sm:$0xf]
  %v34 = vld [vmem:[%s8 + $0x4] sm:$0xf]
  %v35 = vunpack.c.l.bf16 %v33
  %v36 = vunpack.c.l.bf16 %v34
  %v37 = vld [vmem:[%s0] sm:$0x1]
  %v39 = vlaneseq
  %v40 = vshrl.u32 %v39, 7
  %v41 = vsub.s32 0, %v40
  %v42 = vrot.slane %v37, %v41
  %v44 = vmul.f32 %v35, %v42
  %v45 = vmul.f32 %v36, %v42
  %v46 = vld [vmem:[%s1] sm:$0x1]
  %v48 = vlaneseq
  %v49 = vshrl.u32 %v48, 7
  %v50 = vsub.s32 0, %v49
  %v51 = vrot.slane %v46, %v50
  %v53 = vadd.f32 %v44, %v51
  %v54 = vadd.f32 %v45, %v51
  %v55 = vpack.c.bf16 %v54, %v53
  %v56 = vld [vmem:[%s2] sm:$0xf]
  %v57 = vld [vmem:[%s2 + $0x4] sm:$0xf]
  %v58 = vld [vmem:[%s2 + $0x8] sm:$0x3]
  %v59 = vld [vmem:[%s3] sm:$0x1]
  %v61 = vlaneseq
  %v62 = vshrl.u32 %v61, 7
  %v63 = vsub.s32 0, %v62
  %v64 = vrot.slane %v59, %v63
  %v69 = vunpack.c.l.b16 %v56
  %v70 = vunpack.c.l.b16 %v57
  %v71 = vunpack.c.l.b16 %v58
  %v72 = vpack.c.b16 %v70, %v69
  %v73 = vpack.c.b16 %v71, %v71
  %vm75 = vcmask 162816
  %v77 = vsel %vm75, %v55, 0
  %vm79 = vcmask 1041408
  %v81 = vsel %vm79, %v73, 0
  %83 = vmatprep.subr.bf16.mxu0 0
  %84 = vmatpush1.bf16.msra.mxu0 %v72
  %85 = vmatprep.subr.bf16.mxu0 0
  %86 = vmatpush1.bf16.msra.mxu0 %v81
  %87 = vmatprep.subr.bf16.mxu0 0
  %88 = vmatpush1.bf16.msra.mxu0 0
  %89 = vmatprep.subr.bf16.mxu0 0
  %90 = vmatpush1.bf16.msra.mxu0 0
  %91 = vmatprep.subr.bf16.mxu0 0
  %92 = vmatpush1.bf16.msra.mxu0 0
  %93 = vmatprep.subr.bf16.mxu0 0
  %94 = vmatpush1.bf16.msra.mxu0 0
  %95 = vmatprep.subr.bf16.mxu0 0
  %96 = vmatpush1.bf16.msra.mxu0 0
  %97 = vmatprep.subr.bf16.mxu0 0
  %98 = vmatpush1.bf16.msra.mxu0 0
  %99 = vmatprep.subr.bf16.mxu0 0
  %100 = vmatpush1.bf16.msra.mxu0 0
  %101 = vmatprep.subr.bf16.mxu0 0
  %102 = vmatpush1.bf16.msra.mxu0 0
  %103 = vmatprep.subr.bf16.mxu0 0
  %104 = vmatpush1.bf16.msra.mxu0 0
  %105 = vmatprep.subr.bf16.mxu0 0
  %106 = vmatpush1.bf16.msra.mxu0 0
  %107 = vmatprep.subr.bf16.mxu0 0
  %108 = vmatpush1.bf16.msra.mxu0 0
  %109 = vmatprep.subr.bf16.mxu0 0
  %110 = vmatpush1.bf16.msra.mxu0 0
  %111 = vmatprep.subr.bf16.mxu0 0
  %112 = vmatpush1.bf16.msra.mxu0 0
  %113 = vmatprep.subr.bf16.mxu0 0
  %114 = vmatpush1.bf16.msra.mxu0 0
  %115 = vmatprep.mubr.bf16.mxu0 0
  %116 = vmatmul.mubr.bf16.gmra.mrb[0].mxu0 %v77
  %v117 = vpop.f32.mrb[0].mxu0
  %v118 = vadd.f32 %v64, %v117
  %v119 = vpop.f32.mrb[0].mxu0
  %v120 = vpop.f32.mrb[0].mxu0
  %v121 = vadd.f32 %v64, %v120
  %v122 = vpop.f32.mrb[0].mxu0
  %123 = vdwg.mxu0
  %v124 = vlaneseq
  %v125 = vand.u32 %v124, 127
  %vm126 = vcmp.lt.s32.totalorder %v125, 32
  %v127 = vmax.f32 %v118, 0.0
  %v128 = vmax.f32 %v121, 0.0
  %v129 = vsel %vm126, %v127, %v118
  %v130 = vsel %vm126, %v128, %v121
  %v131 = vpack.c.bf16 %v130, %v129
  %v132 = vld [vmem:[%s4] sm:$0xf]
  %v133 = vld [vmem:[%s4 + $0x4] sm:$0xf]
  %v134 = vld [vmem:[%s4 + $0x8] sm:$0xf]
  %v135 = vld [vmem:[%s4 + $0xc] sm:$0xf]
  %v136 = vld [vmem:[%s4 + $0x10] sm:$0x3]
  %v137 = vld [vmem:[%s5] sm:$0x1]
  %v139 = vlaneseq
  %v140 = vshrl.u32 %v139, 7
  %v141 = vsub.s32 0, %v140
  %v142 = vrot.slane %v137, %v141
  %v149 = vunpack.c.l.b16 %v132
  %v150 = vunpack.c.l.b16 %v133
  %v151 = vunpack.c.l.b16 %v134
  %v152 = vunpack.c.l.b16 %v135
  %v153 = vunpack.c.l.b16 %v136
  %v154 = vpack.c.b16 %v150, %v149
  %v155 = vpack.c.b16 %v152, %v151
  %v156 = vpack.c.b16 %v153, %v153
  %vm159 = vcmask 293888
  %v161 = vsel %vm159, %v131, 0
  %v164 = vsel %vm79, %v156, 0
  %166 = vmatprep.subr.bf16.mxu0 0
  %167 = vmatpush1.bf16.msra.mxu0 %v154
  %168 = vmatprep.subr.bf16.mxu0 0
  %169 = vmatpush1.bf16.msra.mxu0 %v155
  %170 = vmatprep.subr.bf16.mxu0 0
  %171 = vmatpush1.bf16.msra.mxu0 %v164
  %172 = vmatprep.subr.bf16.mxu0 0
  %173 = vmatpush1.bf16.msra.mxu0 0
  %174 = vmatprep.subr.bf16.mxu0 0
  %175 = vmatpush1.bf16.msra.mxu0 0
  %176 = vmatprep.subr.bf16.mxu0 0
  %177 = vmatpush1.bf16.msra.mxu0 0
  %178 = vmatprep.subr.bf16.mxu0 0
  %179 = vmatpush1.bf16.msra.mxu0 0
  %180 = vmatprep.subr.bf16.mxu0 0
  %181 = vmatpush1.bf16.msra.mxu0 0
  %182 = vmatprep.subr.bf16.mxu0 0
  %183 = vmatpush1.bf16.msra.mxu0 0
  %184 = vmatprep.subr.bf16.mxu0 0
  %185 = vmatpush1.bf16.msra.mxu0 0
  %186 = vmatprep.subr.bf16.mxu0 0
  %187 = vmatpush1.bf16.msra.mxu0 0
  %188 = vmatprep.subr.bf16.mxu0 0
  %189 = vmatpush1.bf16.msra.mxu0 0
  %190 = vmatprep.subr.bf16.mxu0 0
  %191 = vmatpush1.bf16.msra.mxu0 0
  %192 = vmatprep.subr.bf16.mxu0 0
  %193 = vmatpush1.bf16.msra.mxu0 0
  %194 = vmatprep.subr.bf16.mxu0 0
  %195 = vmatpush1.bf16.msra.mxu0 0
  %196 = vmatprep.subr.bf16.mxu0 0
  %197 = vmatpush1.bf16.msra.mxu0 0
  %198 = vmatprep.mubr.bf16.mxu0 0
  %199 = vmatmul.mubr.bf16.gmra.mrb[0].mxu0 %v161
  %v200 = vpop.f32.mrb[0].mxu0
  %v201 = vadd.f32 %v142, %v200
  %v202 = vpop.f32.mrb[0].mxu0
  %v203 = vpop.f32.mrb[0].mxu0
  %v204 = vadd.f32 %v142, %v203
  %v205 = vpop.f32.mrb[0].mxu0
  %206 = vdwg.mxu0
  %v207 = vmax.f32 %v201, 0.0
  %v208 = vmax.f32 %v204, 0.0
  %v209 = vpack.c.bf16 %v208, %v207
  %v210 = vld [vmem:[%s6] sm:$0xf]
  %v211 = vld [vmem:[%s6 + $0x4] sm:$0xf]
  %v212 = vld [vmem:[%s6 + $0x8] sm:$0xf]
  %v213 = vld [vmem:[%s6 + $0xc] sm:$0xf]
  %v214 = vld [vmem:[%s7] sm:$0x1]
  %v216 = vlaneseq
  %v217 = vshrl.u32 %v216, 7
  %v218 = vsub.s32 0, %v217
  %v219 = vrot.slane %v214, %v218
  %v225 = vunpack.c.l.b16 %v210
  %v226 = vunpack.c.l.b16 %v211
  %v227 = vunpack.c.l.b16 %v212
  %v228 = vunpack.c.l.b16 %v213
  %v229 = vpack.c.b16 %v226, %v225
  %v230 = vpack.c.b16 %v228, %v227
  %vm233 = vcmask 261120
  %v235 = vsel %vm233, %v209, 0
  %237 = vmatprep.subr.bf16.mxu0 0
  %238 = vmatpush1.bf16.msra.mxu0 %v229
  %239 = vmatprep.subr.bf16.mxu0 0
  %240 = vmatpush1.bf16.msra.mxu0 %v230
  %241 = vmatprep.subr.bf16.mxu0 0
  %242 = vmatpush1.bf16.msra.mxu0 0
  %243 = vmatprep.subr.bf16.mxu0 0
  %244 = vmatpush1.bf16.msra.mxu0 0
  %245 = vmatprep.subr.bf16.mxu0 0
  %246 = vmatpush1.bf16.msra.mxu0 0
  %247 = vmatprep.subr.bf16.mxu0 0
  %248 = vmatpush1.bf16.msra.mxu0 0
  %249 = vmatprep.subr.bf16.mxu0 0
  %250 = vmatpush1.bf16.msra.mxu0 0
  %251 = vmatprep.subr.bf16.mxu0 0
  %252 = vmatpush1.bf16.msra.mxu0 0
  %253 = vmatprep.subr.bf16.mxu0 0
  %254 = vmatpush1.bf16.msra.mxu0 0
  %255 = vmatprep.subr.bf16.mxu0 0
  %256 = vmatpush1.bf16.msra.mxu0 0
  %257 = vmatprep.subr.bf16.mxu0 0
  %258 = vmatpush1.bf16.msra.mxu0 0
  %259 = vmatprep.subr.bf16.mxu0 0
  %260 = vmatpush1.bf16.msra.mxu0 0
  %261 = vmatprep.subr.bf16.mxu0 0
  %262 = vmatpush1.bf16.msra.mxu0 0
  %263 = vmatprep.subr.bf16.mxu0 0
  %264 = vmatpush1.bf16.msra.mxu0 0
  %265 = vmatprep.subr.bf16.mxu0 0
  %266 = vmatpush1.bf16.msra.mxu0 0
  %267 = vmatprep.subr.bf16.mxu0 0
  %268 = vmatpush1.bf16.msra.mxu0 0
  %269 = vmatprep.mubr.bf16.mxu0 0
  %270 = vmatmul.mubr.bf16.gmra.mrb[0].mxu0 %v235
  %v271 = vpop.f32.mrb[0].mxu0
  %v272 = vadd.f32 %v219, %v271
  %v273 = vpop.f32.mrb[0].mxu0
  %v274 = vpop.f32.mrb[0].mxu0
  %v275 = vadd.f32 %v219, %v274
  %v276 = vpop.f32.mrb[0].mxu0
  %277 = vdwg.mxu0
  %vm278 = vcmask 64512
  %279 = vst.msk [vmem:[%s9] sm:$0xff] %vm278, %v272
  %280 = vst.msk [vmem:[%s9 + $0x8] sm:$0xff] %vm278, %v275
  // Predicated region
  $region38: #{tpu_custom_call.1} parent=0 // pred_check
    _
  $region39: #{tpu_custom_call.1} parent=0 // pred_check_branch
    %282 = sbr.rel (0) target = $region41
  $region40: #{tpu_custom_call.1} parent=0 // pred_region
    _
  $region41: #{tpu_custom_call.1} parent=0 // pred_fallthru
    _
  // Predicated region
  $region42: #{tpu_custom_call.1} parent=0 // pred_check
    _
  $region43: #{tpu_custom_call.1} parent=0 // pred_check_branch
    %284 = sbr.rel (0) target = $region45
  $region44: #{tpu_custom_call.1} parent=0 // pred_region
    _
  $region45: #{tpu_custom_call.1} parent=0 // pred_fallthru
    _

</llo_original>
